<compile_context>
chip_gen: v5e
topology: v5e:2x2
jax: 0.10.0
libtpu: 0.0.40
codegen_flags: <defaults>
</compile_context>

<pallas_src>
import functools

import jax
import jax.numpy as jnp
from jax.experimental import pallas as pl
from jax.experimental.pallas import tpu as pltpu

LANE = 128
_MIB = 1024 * 1024


def _round_up(n, m):
    return ((n + m - 1) // m) * m


# ----------------------------------------------------------------------------- kernel
def mlp_kernel(x_ref, w1_ref, b1_ref, w2_ref, b2_ref, w3_ref, b3_ref, o_ref):
    """Fused 3-layer MLP on one (block_b, S) row tile.

    Weights arrive pre-padded and pre-cast (bf16 on the fast path); only the
    activations are cast in-kernel. Matmuls accumulate in f32 on the MXU;
    bias-add / ReLU stay in f32 on the VPU.
    """
    cdt = w1_ref.dtype  # compute dtype was chosen once at prepare time

    x = x_ref[...].astype(cdt)

    h1 = jnp.dot(x, w1_ref[...], preferred_element_type=jnp.float32) + b1_ref[...]
    h1 = jnp.maximum(h1, 0.0)

    h2 = jnp.dot(h1.astype(cdt), w2_ref[...], preferred_element_type=jnp.float32) + b2_ref[...]
    h2 = jnp.maximum(h2, 0.0)

    out = jnp.dot(h2.astype(cdt), w3_ref[...], preferred_element_type=jnp.float32) + b3_ref[...]
    o_ref[...] = out.astype(o_ref.dtype)


# ----------------------------------------------------------------------------- params
def prepare_mlp_params(params, compute_dtype=jnp.bfloat16):
    """Pad feature dims to lane multiples and cast weights to compute_dtype ONCE.

    The contraction dim of the first layer (state_size) is deliberately left
    unpadded: x is the only per-step streamed input and Mosaic handles K<128
    matmuls fine. Padded weight rows/cols are zero -> ReLU(0)=0 -> results for
    the valid columns are unchanged. Biases stay f32 (added post-accumulation).
    """
    w1, b1, w2, b2, w3, b3 = params
    S, H0 = w1.shape
    H1, A = w2.shape[1], w3.shape[1]
    H0_p, H1_p, A_p = (_round_up(d, LANE) for d in (H0, H1, A))

    padw = lambda w, r, c: jnp.pad(
        w, ((0, r - w.shape[0]), (0, c - w.shape[1]))).astype(compute_dtype)
    padb = lambda b, c: jnp.pad(
        b, ((0, 0), (0, c - b.shape[1]))).astype(jnp.float32)

    return (padw(w1, S, H0_p), padb(b1, H0_p),
            padw(w2, H0_p, H1_p), padb(b2, H1_p),
            padw(w3, H1_p, A_p), padb(b3, A_p))


# ----------------------------------------------------------------------------- forward
@functools.partial(jax.jit, static_argnames=("action_size", "block_b"))
def mlp_forward(x, w1, b1, w2, b2, w3, b3, *, action_size, block_b=256):
    """y = ReLU(x@W1+b1) -> ReLU(.@W2+b2) -> .@W3+b3 with pre-padded/cast params."""
    B, S = x.shape
    H0_p, H1_p, A_p = w1.shape[1], w2.shape[1], w3.shape[1]

    # Row tiling: fewer, bigger tiles win at small batch (single grid step on
    # v5e/v6e); pass a smaller block_b for megacore split / huge batches.
    block_b = min(block_b, _round_up(B, 8))
    B_p = _round_up(B, block_b)
    x_p = jnp.pad(x, ((0, B_p - B), (0, 0))) if B_p != B else x

    grid = (B_p // block_b,)
    resident = lambda r, c: pl.BlockSpec((r, c), lambda i: (0, 0))  # weights stay in VMEM

    # VMEM budget (default pipelining double-buffers every input block).
    # TODO(synk): single-buffer the constant-index weight blocks / add an H-tiled
    # grid axis once hidden dims grow past the v7x 64 MiB VMEM budget.
    w_item = jnp.dtype(w1.dtype).itemsize
    weight_bytes = (S * H0_p + H0_p * H1_p + H1_p * A_p) * w_item
    bias_bytes = (H0_p + H1_p + A_p) * 4
    stream_bytes = 2 * block_b * (S + A_p) * 4          # double-buffered x / out tiles
    interm_bytes = block_b * (H0_p + H1_p) * 4          # h1 / h2 live values
    vmem_limit = int(min(
        max(2 * (weight_bytes + bias_bytes) + stream_bytes + interm_bytes + 4 * _MIB,
            32 * _MIB),
        64 * _MIB))

    flops = 2 * B_p * (S * H0_p + H0_p * H1_p + H1_p * A_p)
    bytes_accessed = (B_p * S * x.dtype.itemsize        # streamed input (unpadded S)
                      + weight_bytes + bias_bytes       # actual (pre-cast) weight DMA
                      + B_p * A_p * 4)                  # f32 output writeback

    out = pl.pallas_call(
        mlp_kernel,
        out_shape=jax.ShapeDtypeStruct((B_p, A_p), jnp.float32),
        grid_spec=pltpu.PrefetchScalarGridSpec(
            num_scalar_prefetch=0,
            grid=grid,
            in_specs=[
                pl.BlockSpec((block_b, S), lambda i: (i, 0)),   # x: row-tiled, S unpadded
                resident(S, H0_p), resident(1, H0_p),           # fc1
                resident(H0_p, H1_p), resident(1, H1_p),        # fc2
                resident(H1_p, A_p), resident(1, A_p),          # fc3
            ],
            out_specs=pl.BlockSpec((block_b, A_p), lambda i: (i, 0)),
        ),
        compiler_params=pltpu.CompilerParams(
            dimension_semantics=("parallel",),                  # megacore row split on v7x
            vmem_limit_bytes=vmem_limit,
        ),
        cost_estimate=pl.CostEstimate(
            flops=flops, transcendentals=0, bytes_accessed=bytes_accessed),
    )(x_p, w1, b1, w2, b2, w3, b3)

    return out[:B, :action_size].astype(x.dtype)


# ----------------------------------------------------------------------------- helpers
def init_mlp_params(key, state_size, hidden, action_size, dtype=jnp.float32):
    """Deterministic init mimicking nn.Linear default (uniform +/- 1/sqrt(fan_in))."""
    h0, h1 = hidden
    keys = jax.random.split(key, 6)

    def linear(kw, kb, fan_in, fan_out):
        bound = 1.0 / jnp.sqrt(fan_in)
        w = jax.random.uniform(kw, (fan_in, fan_out), dtype, -bound, bound)
        b = jax.random.uniform(kb, (1, fan_out), dtype, -bound, bound)
        return w, b

    w1, b1 = linear(keys[0], keys[1], state_size, h0)
    w2, b2 = linear(keys[2], keys[3], h0, h1)
    w3, b3 = linear(keys[4], keys[5], h1, action_size)
    return (w1, b1, w2, b2, w3, b3)


def mlp_reference(x, params):
    w1, b1, w2, b2, w3, b3 = params
    h1 = jnp.maximum(x @ w1 + b1, 0.0)
    h2 = jnp.maximum(h1 @ w2 + b2, 0.0)
    return h2 @ w3 + b3


def mlp_reference_cast(x, params, compute_dtype):
    """Reference with matmul operands in compute_dtype, f32 accumulation."""
    w1, b1, w2, b2, w3, b3 = params
    dot = lambda a, b: jnp.dot(a.astype(compute_dtype), b.astype(compute_dtype),
                               preferred_element_type=jnp.float32)
    h1 = jnp.maximum(dot(x, w1) + b1, 0.0)
    h2 = jnp.maximum(dot(h1, w2) + b2, 0.0)
    return dot(h2, w3) + b3


# ----------------------------------------------------------------------------- main
if __name__ == "__main__":
    # Small shapes consistent with MLP(state_size, action_size, hidden_size=(h0, h1)).
    batch = 256
    state_size = 32
    hidden = (256, 128)
    action_size = 16

    key = jax.random.PRNGKey(0)
    k_x, k_p = jax.random.split(key)
    x = jax.random.normal(k_x, (batch, state_size), dtype=jnp.float32)
    raw_params = init_mlp_params(k_p, state_size, hidden, action_size)

    # f32 path, single grid step (block_b == batch): tight check vs pure-JAX reference.
    p_f32 = prepare_mlp_params(raw_params, jnp.float32)
    out = jax.block_until_ready(
        mlp_forward(x, *p_f32, action_size=action_size, block_b=256))
    ref = mlp_reference(x, raw_params)
    assert out.shape == (batch, action_size)
    assert jnp.allclose(out, ref, atol=5e-4, rtol=5e-4), "f32 mismatch vs reference"

    # bf16 path: weights pre-cast once; two "parallel" row tiles exercise the grid.
    p_bf16 = prepare_mlp_params(raw_params, jnp.bfloat16)
    out_bf16 = jax.block_until_ready(
        mlp_forward(x, *p_bf16, action_size=action_size, block_b=128))
    ref_bf16 = mlp_reference_cast(x, raw_params, jnp.bfloat16)
    assert out_bf16.shape == (batch, action_size)
    assert jnp.allclose(out_bf16, ref_bf16, atol=5e-2, rtol=5e-2), "bf16 mismatch vs reference"

    print("KERNEL_OK")
</pallas_src>

<mosaic_0001>
module attributes {stable_mosaic.version = 11 : i64} {
  func.func @mlp_kernel(%arg0: i32, %arg1: memref<256x32xf32, #tpu.memory_space<vmem>>, %arg2: memref<32x256xf32, #tpu.memory_space<vmem>>, %arg3: memref<1x256xf32, #tpu.memory_space<vmem>>, %arg4: memref<256x128xf32, #tpu.memory_space<vmem>>, %arg5: memref<1x128xf32, #tpu.memory_space<vmem>>, %arg6: memref<128x128xf32, #tpu.memory_space<vmem>>, %arg7: memref<1x128xf32, #tpu.memory_space<vmem>>, %arg8: memref<256x128xf32, #tpu.memory_space<vmem>>) attributes {dimension_semantics = [#tpu.dimension_semantics<parallel>], iteration_bounds = array<i64: 1>, scalar_prefetch = 0 : i64, scratch_operands = 0 : i64, tpu.core_type = #tpu.core_type<tc>, window_params = [{transform_indices = @transform_0, window_bounds = array<i64: 256, 32>}, {pipeline_mode = #tpu.pipeline_mode<synchronous>, transform_indices = @transform_1, window_bounds = array<i64: 32, 256>}, {pipeline_mode = #tpu.pipeline_mode<synchronous>, transform_indices = @transform_2, window_bounds = array<i64: 1, 256>}, {pipeline_mode = #tpu.pipeline_mode<synchronous>, transform_indices = @transform_3, window_bounds = array<i64: 256, 128>}, {pipeline_mode = #tpu.pipeline_mode<synchronous>, transform_indices = @transform_4, window_bounds = array<i64: 1, 128>}, {pipeline_mode = #tpu.pipeline_mode<synchronous>, transform_indices = @transform_5, window_bounds = array<i64: 128, 128>}, {pipeline_mode = #tpu.pipeline_mode<synchronous>, transform_indices = @transform_6, window_bounds = array<i64: 1, 128>}, {transform_indices = @transform_7, window_bounds = array<i64: 256, 128>}]} {
    %c0 = arith.constant 0 : index
    %c0_0 = arith.constant 0 : index
    %0 = vector.load %arg1[%c0, %c0_0] : memref<256x32xf32, #tpu.memory_space<vmem>>, vector<256x32xf32>
    %c0_1 = arith.constant 0 : index
    %c0_2 = arith.constant 0 : index
    %1 = vector.load %arg2[%c0_1, %c0_2] : memref<32x256xf32, #tpu.memory_space<vmem>>, vector<32x256xf32>
    %cst = arith.constant dense<0.000000e+00> : vector<256x256xf32>
    %2 = tpu.matmul %0, %1, %cst {dimension_numbers = #tpu.dot_dimension_numbers<[1], [0], [0], [1], [0, 0, 1, 1], [], []>} : vector<256x32xf32>, vector<32x256xf32>, vector<256x256xf32> -> vector<256x256xf32>
    %c0_3 = arith.constant 0 : index
    %c0_4 = arith.constant 0 : index
    %3 = vector.load %arg3[%c0_3, %c0_4] : memref<1x256xf32, #tpu.memory_space<vmem>>, vector<1x256xf32>
    %4 = vector.broadcast %3 : vector<1x256xf32> to vector<256x256xf32>
    %5 = arith.addf %2, %4 : vector<256x256xf32>
    %cst_5 = arith.constant 0.000000e+00 : f32
    %6 = vector.broadcast %cst_5 : f32 to vector<256x256xf32>
    %7 = arith.maximumf %5, %6 : vector<256x256xf32>
    %c0_6 = arith.constant 0 : index
    %c0_7 = arith.constant 0 : index
    %8 = vector.load %arg4[%c0_6, %c0_7] : memref<256x128xf32, #tpu.memory_space<vmem>>, vector<256x128xf32>
    %cst_8 = arith.constant dense<0.000000e+00> : vector<256x128xf32>
    %9 = tpu.matmul %7, %8, %cst_8 {dimension_numbers = #tpu.dot_dimension_numbers<[1], [0], [0], [1], [0, 0, 1, 1], [], []>} : vector<256x256xf32>, vector<256x128xf32>, vector<256x128xf32> -> vector<256x128xf32>
    %c0_9 = arith.constant 0 : index
    %c0_10 = arith.constant 0 : index
    %10 = vector.load %arg5[%c0_9, %c0_10] : memref<1x128xf32, #tpu.memory_space<vmem>>, vector<1x128xf32>
    %11 = vector.broadcast %10 : vector<1x128xf32> to vector<256x128xf32>
    %12 = arith.addf %9, %11 : vector<256x128xf32>
    %cst_11 = arith.constant 0.000000e+00 : f32
    %13 = vector.broadcast %cst_11 : f32 to vector<256x128xf32>
    %14 = arith.maximumf %12, %13 : vector<256x128xf32>
    %c0_12 = arith.constant 0 : index
    %c0_13 = arith.constant 0 : index
    %15 = vector.load %arg6[%c0_12, %c0_13] : memref<128x128xf32, #tpu.memory_space<vmem>>, vector<128x128xf32>
    %cst_14 = arith.constant dense<0.000000e+00> : vector<256x128xf32>
    %16 = tpu.matmul %14, %15, %cst_14 {dimension_numbers = #tpu.dot_dimension_numbers<[1], [0], [0], [1], [0, 0, 1, 1], [], []>} : vector<256x128xf32>, vector<128x128xf32>, vector<256x128xf32> -> vector<256x128xf32>
    %c0_15 = arith.constant 0 : index
    %c0_16 = arith.constant 0 : index
    %17 = vector.load %arg7[%c0_15, %c0_16] : memref<1x128xf32, #tpu.memory_space<vmem>>, vector<1x128xf32>
    %18 = vector.broadcast %17 : vector<1x128xf32> to vector<256x128xf32>
    %19 = arith.addf %16, %18 : vector<256x128xf32>
    %c0_17 = arith.constant 0 : index
    %c0_18 = arith.constant 0 : index
    %20 = vector.load %arg8[%c0_17, %c0_18] : memref<256x128xf32, #tpu.memory_space<vmem>>, vector<256x128xf32>
    tpu.vector_store %arg8[%c0_17, %c0_18], %19 {strides = array<i32>} : memref<256x128xf32, #tpu.memory_space<vmem>>, vector<256x128xf32>,
    return
  }
  func.func @transform_0(%arg0: i32) -> (i32, i32) {
    %c0_i32 = arith.constant 0 : i32
    %c0_i32_0 = arith.constant 0 : i32
    return %arg0, %c0_i32 : i32, i32
  }
  func.func @transform_1(%arg0: i32) -> (i32, i32) {
    %c0_i32 = arith.constant 0 : i32
    %c0_i32_0 = arith.constant 0 : i32
    %c0_i32_1 = arith.constant 0 : i32
    return %c0_i32, %c0_i32_0 : i32, i32
  }
  func.func @transform_2(%arg0: i32) -> (i32, i32) {
    %c0_i32 = arith.constant 0 : i32
    %c0_i32_0 = arith.constant 0 : i32
    %c0_i32_1 = arith.constant 0 : i32
    return %c0_i32, %c0_i32_0 : i32, i32
  }
  func.func @transform_3(%arg0: i32) -> (i32, i32) {
    %c0_i32 = arith.constant 0 : i32
    %c0_i32_0 = arith.constant 0 : i32
    %c0_i32_1 = arith.constant 0 : i32
    return %c0_i32, %c0_i32_0 : i32, i32
  }
  func.func @transform_4(%arg0: i32) -> (i32, i32) {
    %c0_i32 = arith.constant 0 : i32
    %c0_i32_0 = arith.constant 0 : i32
    %c0_i32_1 = arith.constant 0 : i32
    return %c0_i32, %c0_i32_0 : i32, i32
  }
  func.func @transform_5(%arg0: i32) -> (i32, i32) {
    %c0_i32 = arith.constant 0 : i32
    %c0_i32_0 = arith.constant 0 : i32
    %c0_i32_1 = arith.constant 0 : i32
    return %c0_i32, %c0_i32_0 : i32, i32
  }
  func.func @transform_6(%arg0: i32) -> (i32, i32) {
    %c0_i32 = arith.constant 0 : i32
    %c0_i32_0 = arith.constant 0 : i32
    %c0_i32_1 = arith.constant 0 : i32
    return %c0_i32, %c0_i32_0 : i32, i32
  }
  func.func @transform_7(%arg0: i32) -> (i32, i32) {
    %c0_i32 = arith.constant 0 : i32
    %c0_i32_0 = arith.constant 0 : i32
    return %arg0, %c0_i32 : i32, i32
  }
}

</mosaic_0001>

<llo_original>
// kernel: mlp_forward.1
$region0: #{mlp_forward.1}
  #allocation0 [shape = 'u32[]', space=smem, size = 0x4, offset = 0x4, fixed_abs, tag = 'smem constant byte address 0x4 - core index']
  #allocation1 [shape = 'u32[72,128]{1,0:T(1,128)}', space=vmem, size = 0x9000, scoped, tag = 'internal scratch']
  %s0 = inlined_call_operand.vmem [shape: f32[256,32], index: 0, kind: input, shape index: {}]
  %s1 = inlined_call_operand.vmem [shape: f32[32,256], index: 1, kind: input, shape index: {}]
  %s2 = inlined_call_operand.vmem [shape: f32[1,256], index: 2, kind: input, shape index: {}]
  %s3 = inlined_call_operand.vmem [shape: f32[256,128], index: 3, kind: input, shape index: {}]
  %s4 = inlined_call_operand.vmem [shape: f32[1,128], index: 4, kind: input, shape index: {}]
  %s5 = inlined_call_operand.hbm [shape: f32[128,128], index: 5, kind: input, shape index: {}]
  %s6 = inlined_call_operand.hbm [shape: f32[1,128], index: 6, kind: input, shape index: {}]
  %s7 = inlined_call_operand.vmem [shape: f32[256,128], index: 7, kind: output, shape index: {}]
  %s8 = sld [smem:[#allocation0]]
  $region46: #{mlp_forward.1} parent=0
    _
  %s10 = ssub.s32 1, %s8
  %s11 = scalar_select 0, %s10, %s8
  $region1: #{mlp_forward.1} parent=0
    #allocation2 [shape = 'u8[65536]{0}', space=vmem, size = 0x10000, scoped, tag = 'input window, operand 5, single buffered']
    #allocation3 [shape = 's32[1]{0}', space=sflag, size = 0x4, scoped, tag = 'scoped memory for mlp_forward.1']
    #allocation4 [shape = 'u8[512]{0}', space=vmem, size = 0x400, scoped, tag = 'input window, operand 6, single buffered']
    #allocation5 [shape = 's32[1]{0}', space=sflag, size = 0x4, scoped, tag = 'scoped memory for mlp_forward.1']
    %12 = vsyncpa [#allocation3], 0
    %13 = vsyncpa [#allocation5], 0
    // Predicated region
    $region2: #{mlp_forward.1} parent=1 // pred_check
      _
    $region3: #{mlp_forward.1} parent=1 // pred_check_branch
      %15 = sbr.rel (0) target = $region5
    $region4: #{mlp_forward.1} parent=1 // pred_region
      _
    $region5: #{mlp_forward.1} parent=1 // pred_fallthru
      _
    // Predicated region
    $region6: #{mlp_forward.1} parent=1 // pred_check
      _
    $region7: #{mlp_forward.1} parent=1 // pred_check_branch
      %17 = sbr.rel (0) target = $region9
    $region8: #{mlp_forward.1} parent=1 // pred_region
      _
    $region9: #{mlp_forward.1} parent=1 // pred_fallthru
      _
    // Predicated region
    $region10: #{mlp_forward.1} parent=1 // pred_check
      _
    $region11: #{mlp_forward.1} parent=1 // pred_check_branch
      %19 = sbr.rel (0) target = $region13
    $region12: #{mlp_forward.1} parent=1 // pred_region
      _
    $region13: #{mlp_forward.1} parent=1 // pred_fallthru
      _
    // Predicated region
    $region14: #{mlp_forward.1} parent=1 // pred_check
      _
    $region15: #{mlp_forward.1} parent=1 // pred_check_branch
      %21 = sbr.rel (0) target = $region17
    $region16: #{mlp_forward.1} parent=1 // pred_region
      _
    $region17: #{mlp_forward.1} parent=1 // pred_fallthru
      _
    // Predicated region
    $region18: #{mlp_forward.1} parent=1 // pred_check
      _
    $region19: #{mlp_forward.1} parent=1 // pred_check_branch
      %23 = sbr.rel (0) target = $region21
    $region20: #{mlp_forward.1} parent=1 // pred_region
      _
    $region21: #{mlp_forward.1} parent=1 // pred_fallthru
      _
    // Predicated region
    $region22: #{mlp_forward.1} parent=1 // pred_check
      _
    $region23: #{mlp_forward.1} parent=1 // pred_check_branch
      %25 = sbr.rel (0) target = $region25
    $region24: #{mlp_forward.1} parent=1 // pred_region
      %27 = vsyncadd [#allocation3], 0
      %s28 = sshll.u32 %s5, 4
      %s29 = int_to_ptr.hbm [resolvable:$true] %s28
      %s30 = sshll.u32 [#allocation2], 4
      %s31 = int_to_ptr.vmem [resolvable:$true] %s30
      %36 = dma.hbm_to_vmem [thread:$0]  %s29, 2048, %s31, [#allocation3], 128, 128, 8
    $region25: #{mlp_forward.1} parent=1 // pred_fallthru
      _
    // Predicated region
    $region26: #{mlp_forward.1} parent=1 // pred_check
      _
    $region27: #{mlp_forward.1} parent=1 // pred_check_branch
      %38 = sbr.rel (0) target = $region29
    $region28: #{mlp_forward.1} parent=1 // pred_region
      %40 = vsyncadd [#allocation5], 0
      %s42 = sshll.u32 %s6, 4
      %s43 = int_to_ptr.hbm [resolvable:$true] %s42
      %s44 = sshll.u32 [#allocation4], 4
      %s45 = int_to_ptr.vmem [resolvable:$true] %s44
      %47 = dma.hbm_to_vmem [thread:$0]  %s43, 16, %s45, [#allocation5]
    $region29: #{mlp_forward.1} parent=1 // pred_fallthru
      _
    // Predicated region
    $region30: #{mlp_forward.1} parent=1 // pred_check
      _
    $region31: #{mlp_forward.1} parent=1 // pred_check_branch
      %49 = sbr.rel (0) target = $region33
    $region32: #{mlp_forward.1} parent=1 // pred_region
      %51 = dma.done [#allocation3], 2048
    $region33: #{mlp_forward.1} parent=1 // pred_fallthru
      _
    // Predicated region
    $region34: #{mlp_forward.1} parent=1 // pred_check
      _
    $region35: #{mlp_forward.1} parent=1 // pred_check_branch
      %53 = sbr.rel (0) target = $region37
    $region36: #{mlp_forward.1} parent=1 // pred_region
      %55 = dma.done [#allocation5], 16
    $region37: #{mlp_forward.1} parent=1 // pred_fallthru
      _
    %v56 = vld [vmem:[%s0] sm:$0xff]
    %v57 = vld [vmem:[%s0 + $0x8] sm:$0xff]
    %v58 = vld [vmem:[%s0 + $0x10] sm:$0xff]
    %v59 = vld [vmem:[%s0 + $0x18] sm:$0xff]
    %v60 = vld [vmem:[%s0 + $0x20] sm:$0xff]
    %v61 = vld [vmem:[%s0 + $0x28] sm:$0xff]
    %v62 = vld [vmem:[%s0 + $0x30] sm:$0xff]
    %v63 = vld [vmem:[%s0 + $0x38] sm:$0xff]
    %v64 = vld [vmem:[%s0 + $0x40] sm:$0xff]
    %v65 = vld [vmem:[%s0 + $0x48] sm:$0xff]
    %v66 = vld [vmem:[%s0 + $0x50] sm:$0xff]
    %v67 = vld [vmem:[%s0 + $0x58] sm:$0xff]
    %v68 = vld [vmem:[%s0 + $0x60] sm:$0xff]
    %v69 = vld [vmem:[%s0 + $0x68] sm:$0xff]
    %v70 = vld [vmem:[%s0 + $0x70] sm:$0xff]
    %v71 = vld [vmem:[%s0 + $0x78] sm:$0xff]
    %v72 = vld [vmem:[%s0 + $0x80] sm:$0xff]
    %v73 = vld [vmem:[%s0 + $0x88] sm:$0xff]
    %v74 = vld [vmem:[%s0 + $0x90] sm:$0xff]
    %v75 = vld [vmem:[%s0 + $0x98] sm:$0xff]
    %v76 = vld [vmem:[%s0 + $0xa0] sm:$0xff]
    %v77 = vld [vmem:[%s0 + $0xa8] sm:$0xff]
    %v78 = vld [vmem:[%s0 + $0xb0] sm:$0xff]
    %v79 = vld [vmem:[%s0 + $0xb8] sm:$0xff]
    %v80 = vld [vmem:[%s0 + $0xc0] sm:$0xff]
    %v81 = vld [vmem:[%s0 + $0xc8] sm:$0xff]
    %v82 = vld [vmem:[%s0 + $0xd0] sm:$0xff]
    %v83 = vld [vmem:[%s0 + $0xd8] sm:$0xff]
    %v84 = vld [vmem:[%s0 + $0xe0] sm:$0xff]
    %v85 = vld [vmem:[%s0 + $0xe8] sm:$0xff]
    %v86 = vld [vmem:[%s0 + $0xf0] sm:$0xff]
    %v87 = vld [vmem:[%s0 + $0xf8] sm:$0xff]
    %v88 = vld [vmem:[%s1] sm:$0xff]
    %v89 = vld [vmem:[%s1 + $0x8] sm:$0xff]
    %v90 = vld [vmem:[%s1 + $0x10] sm:$0xff]
    %v91 = vld [vmem:[%s1 + $0x18] sm:$0xff]
    %v92 = vld [vmem:[%s1 + $0x20] sm:$0xff]
    %v93 = vld [vmem:[%s1 + $0x28] sm:$0xff]
    %v94 = vld [vmem:[%s1 + $0x30] sm:$0xff]
    %v95 = vld [vmem:[%s1 + $0x38] sm:$0xff]
    %v96 = vld [vmem:[%s2] sm:$0x3]
    %v98 = vperm.slane %v96, 0
    %v99 = vperm.slane %v96, 1
    %vm102 = vcmask 261120
    %v104 = vsel %vm102, %v56, 0
    %v107 = vsel %vm102, %v57, 0
    %v110 = vsel %vm102, %v58, 0
    %v113 = vsel %vm102, %v59, 0
    %v116 = vsel %vm102, %v60, 0
    %v119 = vsel %vm102, %v61, 0
    %v122 = vsel %vm102, %v62, 0
    %v125 = vsel %vm102, %v63, 0
    %v128 = vsel %vm102, %v64, 0
    %v131 = vsel %vm102, %v65, 0
    %v134 = vsel %vm102, %v66, 0
    %v137 = vsel %vm102, %v67, 0
    %v140 = vsel %vm102, %v68, 0
    %v143 = vsel %vm102, %v69, 0
    %v146 = vsel %vm102, %v70, 0
    %v149 = vsel %vm102, %v71, 0
    %v152 = vsel %vm102, %v72, 0
    %v155 = vsel %vm102, %v73, 0
    %v158 = vsel %vm102, %v74, 0
    %v161 = vsel %vm102, %v75, 0
    %v164 = vsel %vm102, %v76, 0
    %v167 = vsel %vm102, %v77, 0
    %v170 = vsel %vm102, %v78, 0
    %v173 = vsel %vm102, %v79, 0
    %v176 = vsel %vm102, %v80, 0
    %v179 = vsel %vm102, %v81, 0
    %v182 = vsel %vm102, %v82, 0
    %v185 = vsel %vm102, %v83, 0
    %v188 = vsel %vm102, %v84, 0
    %v191 = vsel %vm102, %v85, 0
    %v194 = vsel %vm102, %v86, 0
    %v197 = vsel %vm102, %v87, 0
    %199 = vmatpush.msra.mxu0 0.0
    %200 = vmatpush.msra.mxu0 0.0
    %201 = vmatpush.msra.mxu0 0.0
    %202 = vmatpush.msra.mxu0 0.0
    %203 = vmatpush.msra.mxu0 0.0
    %204 = vmatpush.msra.mxu0 0.0
    %205 = vmatpush.msra.mxu0 0.0
    %206 = vmatpush.msra.mxu0 0.0
    %207 = vmatpush.msra.mxu0 0.0
    %208 = vmatpush.msra.mxu0 0.0
    %209 = vmatpush.msra.mxu0 0.0
    %210 = vmatpush.msra.mxu0 0.0
    %211 = vmatpush.msra.mxu0 %v94
    %212 = vmatpush.msra.mxu0 %v92
    %213 = vmatpush.msra.mxu0 %v90
    %214 = vmatpush.msra.mxu0 %v88
    %215 = vmatmul.f32.gmra.mxu0 %v104
    %v216 = vpop.f32.mrf.mxu0
    %v217 = vadd.f32 %v98, %v216
    %218 = vmatmul.f32.gmra.mxu0 %v107
    %v219 = vpop.f32.mrf.mxu0
    %v220 = vadd.f32 %v98, %v219
    %221 = vmatmul.f32.gmra.mxu0 %v110
    %v222 = vpop.f32.mrf.mxu0
    %v223 = vadd.f32 %v98, %v222
    %224 = vmatmul.f32.gmra.mxu0 %v113
    %v225 = vpop.f32.mrf.mxu0
    %v226 = vadd.f32 %v98, %v225
    %227 = vmatmul.f32.gmra.mxu0 %v116
    %v228 = vpop.f32.mrf.mxu0
    %v229 = vadd.f32 %v98, %v228
    %230 = vmatmul.f32.gmra.mxu0 %v119
    %v231 = vpop.f32.mrf.mxu0
    %v232 = vadd.f32 %v98, %v231
    %233 = vmatmul.f32.gmra.mxu0 %v122
    %v234 = vpop.f32.mrf.mxu0
    %v235 = vadd.f32 %v98, %v234
    %236 = vmatmul.f32.gmra.mxu0 %v125
    %v237 = vpop.f32.mrf.mxu0
    %v238 = vadd.f32 %v98, %v237
    %239 = vmatmul.f32.gmra.mxu0 %v128
    %v240 = vpop.f32.mrf.mxu0
    %v241 = vadd.f32 %v98, %v240
    %242 = vmatmul.f32.gmra.mxu0 %v131
    %v243 = vpop.f32.mrf.mxu0
    %v244 = vadd.f32 %v98, %v243
    %245 = vmatmul.f32.gmra.mxu0 %v134
    %v246 = vpop.f32.mrf.mxu0
    %v247 = vadd.f32 %v98, %v246
    %248 = vmatmul.f32.gmra.mxu0 %v137
    %v249 = vpop.f32.mrf.mxu0
    %v250 = vadd.f32 %v98, %v249
    %251 = vmatmul.f32.gmra.mxu0 %v140
    %v252 = vpop.f32.mrf.mxu0
    %v253 = vadd.f32 %v98, %v252
    %254 = vmatmul.f32.gmra.mxu0 %v143
    %v255 = vpop.f32.mrf.mxu0
    %v256 = vadd.f32 %v98, %v255
    %257 = vmatmul.f32.gmra.mxu0 %v146
    %v258 = vpop.f32.mrf.mxu0
    %v259 = vadd.f32 %v98, %v258
    %260 = vmatmul.f32.gmra.mxu0 %v149
    %v261 = vpop.f32.mrf.mxu0
    %v262 = vadd.f32 %v98, %v261
    %263 = vmatmul.f32.gmra.mxu0 %v152
    %v264 = vpop.f32.mrf.mxu0
    %v265 = vadd.f32 %v98, %v264
    %266 = vmatmul.f32.gmra.mxu0 %v155
    %v267 = vpop.f32.mrf.mxu0
    %v268 = vadd.f32 %v98, %v267
    %269 = vmatmul.f32.gmra.mxu0 %v158
    %v270 = vpop.f32.mrf.mxu0
    %v271 = vadd.f32 %v98, %v270
    %272 = vmatmul.f32.gmra.mxu0 %v161
    %v273 = vpop.f32.mrf.mxu0
    %v274 = vadd.f32 %v98, %v273
    %275 = vmatmul.f32.gmra.mxu0 %v164
    %v276 = vpop.f32.mrf.mxu0
    %v277 = vadd.f32 %v98, %v276
    %278 = vmatmul.f32.gmra.mxu0 %v167
    %v279 = vpop.f32.mrf.mxu0
    %v280 = vadd.f32 %v98, %v279
    %281 = vmatmul.f32.gmra.mxu0 %v170
    %v282 = vpop.f32.mrf.mxu0
    %v283 = vadd.f32 %v98, %v282
    %284 = vmatmul.f32.gmra.mxu0 %v173
    %v285 = vpop.f32.mrf.mxu0
    %v286 = vadd.f32 %v98, %v285
    %287 = vmatmul.f32.gmra.mxu0 %v176
    %v288 = vpop.f32.mrf.mxu0
    %v289 = vadd.f32 %v98, %v288
    %290 = vmatmul.f32.gmra.mxu0 %v179
    %v291 = vpop.f32.mrf.mxu0
    %v292 = vadd.f32 %v98, %v291
    %293 = vmatmul.f32.gmra.mxu0 %v182
    %v294 = vpop.f32.mrf.mxu0
    %v295 = vadd.f32 %v98, %v294
    %296 = vmatmul.f32.gmra.mxu0 %v185
    %v297 = vpop.f32.mrf.mxu0
    %v298 = vadd.f32 %v98, %v297
    %299 = vmatmul.f32.gmra.mxu0 %v188
    %v300 = vpop.f32.mrf.mxu0
    %v301 = vadd.f32 %v98, %v300
    %302 = vmatmul.f32.gmra.mxu0 %v191
    %v303 = vpop.f32.mrf.mxu0
    %v304 = vadd.f32 %v98, %v303
    %305 = vmatmul.f32.gmra.mxu0 %v194
    %v306 = vpop.f32.mrf.mxu0
    %v307 = vadd.f32 %v98, %v306
    %308 = vmatmul.f32.gmra.mxu0 %v197
    %v309 = vpop.f32.mrf.mxu0
    %v310 = vadd.f32 %v98, %v309
    %311 = vdwg.mxu0
    %312 = vmatpush.msra.mxu0 0.0
    %313 = vmatpush.msra.mxu0 0.0
    %314 = vmatpush.msra.mxu0 0.0
    %315 = vmatpush.msra.mxu0 0.0
    %316 = vmatpush.msra.mxu0 0.0
    %317 = vmatpush.msra.mxu0 0.0
    %318 = vmatpush.msra.mxu0 0.0
    %319 = vmatpush.msra.mxu0 0.0
    %320 = vmatpush.msra.mxu0 0.0
    %321 = vmatpush.msra.mxu0 0.0
    %322 = vmatpush.msra.mxu0 0.0
    %323 = vmatpush.msra.mxu0 0.0
    %324 = vmatpush.msra.mxu0 %v95
    %325 = vmatpush.msra.mxu0 %v93
    %326 = vmatpush.msra.mxu0 %v91
    %327 = vmatpush.msra.mxu0 %v89
    %328 = vmatmul.f32.gmra.mxu0 %v104
    %v329 = vpop.f32.mrf.mxu0
    %v330 = vadd.f32 %v99, %v329
    %331 = vmatmul.f32.gmra.mxu0 %v107
    %v332 = vpop.f32.mrf.mxu0
    %v333 = vadd.f32 %v99, %v332
    %334 = vmatmul.f32.gmra.mxu0 %v110
    %v335 = vpop.f32.mrf.mxu0
    %v336 = vadd.f32 %v99, %v335
    %337 = vmatmul.f32.gmra.mxu0 %v113
    %v338 = vpop.f32.mrf.mxu0
    %v339 = vadd.f32 %v99, %v338
    %340 = vmatmul.f32.gmra.mxu0 %v116
    %v341 = vpop.f32.mrf.mxu0
    %v342 = vadd.f32 %v99, %v341
    %343 = vmatmul.f32.gmra.mxu0 %v119
    %v344 = vpop.f32.mrf.mxu0
    %v345 = vadd.f32 %v99, %v344
    %346 = vmatmul.f32.gmra.mxu0 %v122
    %v347 = vpop.f32.mrf.mxu0
    %v348 = vadd.f32 %v99, %v347
    %349 = vmatmul.f32.gmra.mxu0 %v125
    %v350 = vpop.f32.mrf.mxu0
    %v351 = vadd.f32 %v99, %v350
    %352 = vmatmul.f32.gmra.mxu0 %v128
    %v353 = vpop.f32.mrf.mxu0
    %v354 = vadd.f32 %v99, %v353
    %355 = vmatmul.f32.gmra.mxu0 %v131
    %v356 = vpop.f32.mrf.mxu0
    %v357 = vadd.f32 %v99, %v356
    %358 = vmatmul.f32.gmra.mxu0 %v134
    %v359 = vpop.f32.mrf.mxu0
    %v360 = vadd.f32 %v99, %v359
    %361 = vmatmul.f32.gmra.mxu0 %v137
    %v362 = vpop.f32.mrf.mxu0
    %v363 = vadd.f32 %v99, %v362
    %364 = vmatmul.f32.gmra.mxu0 %v140
    %v365 = vpop.f32.mrf.mxu0
    %v366 = vadd.f32 %v99, %v365
    %367 = vmatmul.f32.gmra.mxu0 %v143
    %v368 = vpop.f32.mrf.mxu0
    %v369 = vadd.f32 %v99, %v368
    %370 = vmatmul.f32.gmra.mxu0 %v146
    %v371 = vpop.f32.mrf.mxu0
    %v372 = vadd.f32 %v99, %v371
    %373 = vmatmul.f32.gmra.mxu0 %v149
    %v374 = vpop.f32.mrf.mxu0
    %v375 = vadd.f32 %v99, %v374
    %376 = vmatmul.f32.gmra.mxu0 %v152
    %v377 = vpop.f32.mrf.mxu0
    %v378 = vadd.f32 %v99, %v377
    %379 = vmatmul.f32.gmra.mxu0 %v155
    %v380 = vpop.f32.mrf.mxu0
    %v381 = vadd.f32 %v99, %v380
    %382 = vmatmul.f32.gmra.mxu0 %v158
    %v383 = vpop.f32.mrf.mxu0
    %v384 = vadd.f32 %v99, %v383
    %385 = vmatmul.f32.gmra.mxu0 %v161
    %v386 = vpop.f32.mrf.mxu0
    %v387 = vadd.f32 %v99, %v386
    %388 = vmatmul.f32.gmra.mxu0 %v164
    %v389 = vpop.f32.mrf.mxu0
    %v390 = vadd.f32 %v99, %v389
    %391 = vmatmul.f32.gmra.mxu0 %v167
    %v392 = vpop.f32.mrf.mxu0
    %v393 = vadd.f32 %v99, %v392
    %394 = vmatmul.f32.gmra.mxu0 %v170
    %v395 = vpop.f32.mrf.mxu0
    %v396 = vadd.f32 %v99, %v395
    %397 = vmatmul.f32.gmra.mxu0 %v173
    %v398 = vpop.f32.mrf.mxu0
    %v399 = vadd.f32 %v99, %v398
    %400 = vmatmul.f32.gmra.mxu0 %v176
    %v401 = vpop.f32.mrf.mxu0
    %v402 = vadd.f32 %v99, %v401
    %403 = vmatmul.f32.gmra.mxu0 %v179
    %v404 = vpop.f32.mrf.mxu0
    %v405 = vadd.f32 %v99, %v404
    %406 = vmatmul.f32.gmra.mxu0 %v182
    %v407 = vpop.f32.mrf.mxu0
    %v408 = vadd.f32 %v99, %v407
    %409 = vmatmul.f32.gmra.mxu0 %v185
    %v410 = vpop.f32.mrf.mxu0
    %v411 = vadd.f32 %v99, %v410
    %412 = vmatmul.f32.gmra.mxu0 %v188
    %v413 = vpop.f32.mrf.mxu0
    %v414 = vadd.f32 %v99, %v413
    %415 = vmatmul.f32.gmra.mxu0 %v191
    %v416 = vpop.f32.mrf.mxu0
    %v417 = vadd.f32 %v99, %v416
    %418 = vmatmul.f32.gmra.mxu0 %v194
    %v419 = vpop.f32.mrf.mxu0
    %v420 = vadd.f32 %v99, %v419
    %421 = vmatmul.f32.gmra.mxu0 %v197
    %v422 = vpop.f32.mrf.mxu0
    %v423 = vadd.f32 %v99, %v422
    %424 = vdwg.mxu0
    %v425 = vmax.f32 %v217, 0.0
    %v426 = vmax.f32 %v330, 0.0
    %v427 = vmax.f32 %v220, 0.0
    %v428 = vmax.f32 %v333, 0.0
    %v429 = vmax.f32 %v223, 0.0
    %v430 = vmax.f32 %v336, 0.0
    %v431 = vmax.f32 %v226, 0.0
    %v432 = vmax.f32 %v339, 0.0
    %v433 = vmax.f32 %v229, 0.0
    %v434 = vmax.f32 %v342, 0.0
    %v435 = vmax.f32 %v232, 0.0
    %v436 = vmax.f32 %v345, 0.0
    %v437 = vmax.f32 %v235, 0.0
    %v438 = vmax.f32 %v348, 0.0
    %v439 = vmax.f32 %v238, 0.0
    %v440 = vmax.f32 %v351, 0.0
    %v441 = vmax.f32 %v241, 0.0
    %v442 = vmax.f32 %v354, 0.0
    %v443 = vmax.f32 %v244, 0.0
    %v444 = vmax.f32 %v357, 0.0
    %v445 = vmax.f32 %v247, 0.0
    %v446 = vmax.f32 %v360, 0.0
    %v447 = vmax.f32 %v250, 0.0
    %v448 = vmax.f32 %v363, 0.0
    %v449 = vmax.f32 %v253, 0.0
    %v450 = vmax.f32 %v366, 0.0
    %v451 = vmax.f32 %v256, 0.0
    %v452 = vmax.f32 %v369, 0.0
    %v453 = vmax.f32 %v259, 0.0
    %v454 = vmax.f32 %v372, 0.0
    %v455 = vmax.f32 %v262, 0.0
    %v456 = vmax.f32 %v375, 0.0
    %v457 = vmax.f32 %v265, 0.0
    %v458 = vmax.f32 %v378, 0.0
    %v459 = vmax.f32 %v268, 0.0
    %v460 = vmax.f32 %v381, 0.0
    %v461 = vmax.f32 %v271, 0.0
    %v462 = vmax.f32 %v384, 0.0
    %v463 = vmax.f32 %v274, 0.0
    %v464 = vmax.f32 %v387, 0.0
    %v465 = vmax.f32 %v277, 0.0
    %v466 = vmax.f32 %v390, 0.0
    %v467 = vmax.f32 %v280, 0.0
    %v468 = vmax.f32 %v393, 0.0
    %v469 = vmax.f32 %v283, 0.0
    %v470 = vmax.f32 %v396, 0.0
    %v471 = vmax.f32 %v286, 0.0
    %v472 = vmax.f32 %v399, 0.0
    %v473 = vmax.f32 %v289, 0.0
    %v474 = vmax.f32 %v402, 0.0
    %v475 = vmax.f32 %v292, 0.0
    %v476 = vmax.f32 %v405, 0.0
    %v477 = vmax.f32 %v295, 0.0
    %v478 = vmax.f32 %v408, 0.0
    %v479 = vmax.f32 %v298, 0.0
    %v480 = vmax.f32 %v411, 0.0
    %v481 = vmax.f32 %v301, 0.0
    %v482 = vmax.f32 %v414, 0.0
    %v483 = vmax.f32 %v304, 0.0
    %v484 = vmax.f32 %v417, 0.0
    %v485 = vmax.f32 %v307, 0.0
    %v486 = vmax.f32 %v420, 0.0
    %v487 = vmax.f32 %v310, 0.0
    %v488 = vmax.f32 %v423, 0.0
    %v489 = vld [vmem:[%s3] sm:$0xff]
    %v490 = vld [vmem:[%s3 + $0x8] sm:$0xff]
    %v491 = vld [vmem:[%s3 + $0x10] sm:$0xff]
    %v492 = vld [vmem:[%s3 + $0x18] sm:$0xff]
    %v493 = vld [vmem:[%s3 + $0x20] sm:$0xff]
    %v494 = vld [vmem:[%s3 + $0x28] sm:$0xff]
    %v495 = vld [vmem:[%s3 + $0x30] sm:$0xff]
    %v496 = vld [vmem:[%s3 + $0x38] sm:$0xff]
    %v497 = vld [vmem:[%s3 + $0x40] sm:$0xff]
    %v498 = vld [vmem:[%s3 + $0x48] sm:$0xff]
    %v499 = vld [vmem:[%s3 + $0x50] sm:$0xff]
    %v500 = vld [vmem:[%s3 + $0x58] sm:$0xff]
    %v501 = vld [vmem:[%s3 + $0x60] sm:$0xff]
    %v502 = vld [vmem:[%s3 + $0x68] sm:$0xff]
    %v503 = vld [vmem:[%s3 + $0x70] sm:$0xff]
    %v504 = vld [vmem:[%s3 + $0x78] sm:$0xff]
    %v505 = vld [vmem:[%s3 + $0x80] sm:$0xff]
    %v506 = vld [vmem:[%s3 + $0x88] sm:$0xff]
    %v507 = vld [vmem:[%s3 + $0x90] sm:$0xff]
    %v508 = vld [vmem:[%s3 + $0x98] sm:$0xff]
    %v509 = vld [vmem:[%s3 + $0xa0] sm:$0xff]
    %v510 = vld [vmem:[%s3 + $0xa8] sm:$0xff]
    %v511 = vld [vmem:[%s3 + $0xb0] sm:$0xff]
    %v512 = vld [vmem:[%s3 + $0xb8] sm:$0xff]
    %v513 = vld [vmem:[%s3 + $0xc0] sm:$0xff]
    %v514 = vld [vmem:[%s3 + $0xc8] sm:$0xff]
    %v515 = vld [vmem:[%s3 + $0xd0] sm:$0xff]
    %v516 = vld [vmem:[%s3 + $0xd8] sm:$0xff]
    %v517 = vld [vmem:[%s3 + $0xe0] sm:$0xff]
    %v518 = vld [vmem:[%s3 + $0xe8] sm:$0xff]
    %v519 = vld [vmem:[%s3 + $0xf0] sm:$0xff]
    %v520 = vld [vmem:[%s3 + $0xf8] sm:$0xff]
    %v521 = vld [vmem:[%s4] sm:$0x1]
    %v523 = vperm.slane %v521, 0
    %525 = vmatpush.msra.mxu0 %v504
    %526 = vmatpush.msra.mxu0 %v503
    %527 = vmatpush.msra.mxu0 %v502
    %528 = vmatpush.msra.mxu0 %v501
    %529 = vmatpush.msra.mxu0 %v500
    %530 = vmatpush.msra.mxu0 %v499
    %531 = vmatpush.msra.mxu0 %v498
    %532 = vmatpush.msra.mxu0 %v497
    %533 = vmatpush.msra.mxu0 %v496
    %534 = vmatpush.msra.mxu0 %v495
    %535 = vmatpush.msra.mxu0 %v494
    %536 = vmatpush.msra.mxu0 %v493
    %537 = vmatpush.msra.mxu0 %v492
    %538 = vmatpush.msra.mxu0 %v491
    %539 = vmatpush.msra.mxu0 %v490
    %540 = vmatpush.msra.mxu0 %v489
    %541 = vmatmul.f32.gmra.mxu0 %v425
    %v542 = vpop.f32.mrf.mxu0
    %v543 = vadd.f32 %v523, %v542
    %544 = vmatmul.f32.gmra.mxu0 %v427
    %v545 = vpop.f32.mrf.mxu0
    %v546 = vadd.f32 %v523, %v545
    %547 = vmatmul.f32.gmra.mxu0 %v429
    %v548 = vpop.f32.mrf.mxu0
    %v549 = vadd.f32 %v523, %v548
    %550 = vmatmul.f32.gmra.mxu0 %v431
    %v551 = vpop.f32.mrf.mxu0
    %v552 = vadd.f32 %v523, %v551
    %553 = vmatmul.f32.gmra.mxu0 %v433
    %v554 = vpop.f32.mrf.mxu0
    %v555 = vadd.f32 %v523, %v554
    %556 = vmatmul.f32.gmra.mxu0 %v435
    %v557 = vpop.f32.mrf.mxu0
    %v558 = vadd.f32 %v523, %v557
    %559 = vmatmul.f32.gmra.mxu0 %v437
    %v560 = vpop.f32.mrf.mxu0
    %v561 = vadd.f32 %v523, %v560
    %562 = vmatmul.f32.gmra.mxu0 %v439
    %v563 = vpop.f32.mrf.mxu0
    %v564 = vadd.f32 %v523, %v563
    %565 = vmatmul.f32.gmra.mxu0 %v441
    %v566 = vpop.f32.mrf.mxu0
    %v567 = vadd.f32 %v523, %v566
    %568 = vmatmul.f32.gmra.mxu0 %v443
    %v569 = vpop.f32.mrf.mxu0
    %v570 = vadd.f32 %v523, %v569
    %571 = vmatmul.f32.gmra.mxu0 %v445
    %v572 = vpop.f32.mrf.mxu0
    %v573 = vadd.f32 %v523, %v572
    %574 = vmatmul.f32.gmra.mxu0 %v447
    %v575 = vpop.f32.mrf.mxu0
    %v576 = vadd.f32 %v523, %v575
    %577 = vmatmul.f32.gmra.mxu0 %v449
    %v578 = vpop.f32.mrf.mxu0
    %v579 = vadd.f32 %v523, %v578
    %580 = vmatmul.f32.gmra.mxu0 %v451
    %v581 = vpop.f32.mrf.mxu0
    %v582 = vadd.f32 %v523, %v581
    %583 = vmatmul.f32.gmra.mxu0 %v453
    %v584 = vpop.f32.mrf.mxu0
    %v585 = vadd.f32 %v523, %v584
    %586 = vmatmul.f32.gmra.mxu0 %v455
    %v587 = vpop.f32.mrf.mxu0
    %v588 = vadd.f32 %v523, %v587
    %589 = vmatmul.f32.gmra.mxu0 %v457
    %v590 = vpop.f32.mrf.mxu0
    %v591 = vadd.f32 %v523, %v590
    %592 = vmatmul.f32.gmra.mxu0 %v459
    %v593 = vpop.f32.mrf.mxu0
    %v594 = vadd.f32 %v523, %v593
    %595 = vmatmul.f32.gmra.mxu0 %v461
    %v596 = vpop.f32.mrf.mxu0
    %v597 = vadd.f32 %v523, %v596
    %598 = vmatmul.f32.gmra.mxu0 %v463
    %v599 = vpop.f32.mrf.mxu0
    %v600 = vadd.f32 %v523, %v599
    %601 = vmatmul.f32.gmra.mxu0 %v465
    %v602 = vpop.f32.mrf.mxu0
    %v603 = vadd.f32 %v523, %v602
    %604 = vmatmul.f32.gmra.mxu0 %v467
    %v605 = vpop.f32.mrf.mxu0
    %v606 = vadd.f32 %v523, %v605
    %607 = vmatmul.f32.gmra.mxu0 %v469
    %v608 = vpop.f32.mrf.mxu0
    %v609 = vadd.f32 %v523, %v608
    %610 = vmatmul.f32.gmra.mxu0 %v471
    %v611 = vpop.f32.mrf.mxu0
    %v612 = vadd.f32 %v523, %v611
    %613 = vmatmul.f32.gmra.mxu0 %v473
    %v614 = vpop.f32.mrf.mxu0
    %v615 = vadd.f32 %v523, %v614
    %616 = vmatmul.f32.gmra.mxu0 %v475
    %v617 = vpop.f32.mrf.mxu0
    %v618 = vadd.f32 %v523, %v617
    %619 = vmatmul.f32.gmra.mxu0 %v477
    %v620 = vpop.f32.mrf.mxu0
    %v621 = vadd.f32 %v523, %v620
    %622 = vmatmul.f32.gmra.mxu0 %v479
    %v623 = vpop.f32.mrf.mxu0
    %v624 = vadd.f32 %v523, %v623
    %625 = vmatmul.f32.gmra.mxu0 %v481
    %v626 = vpop.f32.mrf.mxu0
    %v627 = vadd.f32 %v523, %v626
    %628 = vmatmul.f32.gmra.mxu0 %v483
    %v629 = vpop.f32.mrf.mxu0
    %v630 = vadd.f32 %v523, %v629
    %631 = vmatmul.f32.gmra.mxu0 %v485
    %v632 = vpop.f32.mrf.mxu0
    %v633 = vadd.f32 %v523, %v632
    %634 = vmatmul.f32.gmra.mxu0 %v487
    %v635 = vpop.f32.mrf.mxu0
    %v636 = vadd.f32 %v523, %v635
    %637 = vdwg.mxu0
    %638 = vmatpush.msra.mxu0 %v520
    %639 = vmatpush.msra.mxu0 %v519
    %640 = vmatpush.msra.mxu0 %v518
    %641 = vmatpush.msra.mxu0 %v517
    %642 = vmatpush.msra.mxu0 %v516
    %643 = vmatpush.msra.mxu0 %v515
    %644 = vmatpush.msra.mxu0 %v514
    %645 = vmatpush.msra.mxu0 %v513
    %646 = vmatpush.msra.mxu0 %v512
    %647 = vmatpush.msra.mxu0 %v511
    %648 = vmatpush.msra.mxu0 %v510
    %649 = vmatpush.msra.mxu0 %v509
    %650 = vmatpush.msra.mxu0 %v508
    %651 = vmatpush.msra.mxu0 %v507
    %652 = vmatpush.msra.mxu0 %v506
    %653 = vmatpush.msra.mxu0 %v505
    %654 = vmatmul.f32.gmra.mxu0 %v426
    %v655 = vpop.f32.mrf.mxu0
    %v656 = vadd.f32 %v543, %v655
    %657 = vmatmul.f32.gmra.mxu0 %v428
    %v658 = vpop.f32.mrf.mxu0
    %v659 = vadd.f32 %v546, %v658
    %660 = vmatmul.f32.gmra.mxu0 %v430
    %v661 = vpop.f32.mrf.mxu0
    %v662 = vadd.f32 %v549, %v661
    %663 = vmatmul.f32.gmra.mxu0 %v432
    %v664 = vpop.f32.mrf.mxu0
    %v665 = vadd.f32 %v552, %v664
    %666 = vmatmul.f32.gmra.mxu0 %v434
    %v667 = vpop.f32.mrf.mxu0
    %v668 = vadd.f32 %v555, %v667
    %669 = vmatmul.f32.gmra.mxu0 %v436
    %v670 = vpop.f32.mrf.mxu0
    %v671 = vadd.f32 %v558, %v670
    %672 = vmatmul.f32.gmra.mxu0 %v438
    %v673 = vpop.f32.mrf.mxu0
    %v674 = vadd.f32 %v561, %v673
    %675 = vmatmul.f32.gmra.mxu0 %v440
    %v676 = vpop.f32.mrf.mxu0
    %v677 = vadd.f32 %v564, %v676
    %678 = vmatmul.f32.gmra.mxu0 %v442
    %v679 = vpop.f32.mrf.mxu0
    %v680 = vadd.f32 %v567, %v679
    %681 = vmatmul.f32.gmra.mxu0 %v444
    %v682 = vpop.f32.mrf.mxu0
    %v683 = vadd.f32 %v570, %v682
    %684 = vmatmul.f32.gmra.mxu0 %v446
    %v685 = vpop.f32.mrf.mxu0
    %v686 = vadd.f32 %v573, %v685
    %687 = vmatmul.f32.gmra.mxu0 %v448
    %v688 = vpop.f32.mrf.mxu0
    %v689 = vadd.f32 %v576, %v688
    %690 = vmatmul.f32.gmra.mxu0 %v450
    %v691 = vpop.f32.mrf.mxu0
    %v692 = vadd.f32 %v579, %v691
    %693 = vmatmul.f32.gmra.mxu0 %v452
    %v694 = vpop.f32.mrf.mxu0
    %v695 = vadd.f32 %v582, %v694
    %696 = vmatmul.f32.gmra.mxu0 %v454
    %v697 = vpop.f32.mrf.mxu0
    %v698 = vadd.f32 %v585, %v697
    %699 = vmatmul.f32.gmra.mxu0 %v456
    %v700 = vpop.f32.mrf.mxu0
    %v701 = vadd.f32 %v588, %v700
    %702 = vmatmul.f32.gmra.mxu0 %v458
    %v703 = vpop.f32.mrf.mxu0
    %v704 = vadd.f32 %v591, %v703
    %705 = vmatmul.f32.gmra.mxu0 %v460
    %v706 = vpop.f32.mrf.mxu0
    %v707 = vadd.f32 %v594, %v706
    %708 = vmatmul.f32.gmra.mxu0 %v462
    %v709 = vpop.f32.mrf.mxu0
    %v710 = vadd.f32 %v597, %v709
    %711 = vmatmul.f32.gmra.mxu0 %v464
    %v712 = vpop.f32.mrf.mxu0
    %v713 = vadd.f32 %v600, %v712
    %714 = vmatmul.f32.gmra.mxu0 %v466
    %v715 = vpop.f32.mrf.mxu0
    %v716 = vadd.f32 %v603, %v715
    %717 = vmatmul.f32.gmra.mxu0 %v468
    %v718 = vpop.f32.mrf.mxu0
    %v719 = vadd.f32 %v606, %v718
    %720 = vmatmul.f32.gmra.mxu0 %v470
    %v721 = vpop.f32.mrf.mxu0
    %v722 = vadd.f32 %v609, %v721
    %723 = vmatmul.f32.gmra.mxu0 %v472
    %v724 = vpop.f32.mrf.mxu0
    %v725 = vadd.f32 %v612, %v724
    %726 = vmatmul.f32.gmra.mxu0 %v474
    %v727 = vpop.f32.mrf.mxu0
    %v728 = vadd.f32 %v615, %v727
    %729 = vmatmul.f32.gmra.mxu0 %v476
    %v730 = vpop.f32.mrf.mxu0
    %v731 = vadd.f32 %v618, %v730
    %732 = vmatmul.f32.gmra.mxu0 %v478
    %v733 = vpop.f32.mrf.mxu0
    %v734 = vadd.f32 %v621, %v733
    %735 = vmatmul.f32.gmra.mxu0 %v480
    %v736 = vpop.f32.mrf.mxu0
    %v737 = vadd.f32 %v624, %v736
    %738 = vmatmul.f32.gmra.mxu0 %v482
    %v739 = vpop.f32.mrf.mxu0
    %v740 = vadd.f32 %v627, %v739
    %741 = vmatmul.f32.gmra.mxu0 %v484
    %v742 = vpop.f32.mrf.mxu0
    %v743 = vadd.f32 %v630, %v742
    %744 = vmatmul.f32.gmra.mxu0 %v486
    %v745 = vpop.f32.mrf.mxu0
    %v746 = vadd.f32 %v633, %v745
    %747 = vmatmul.f32.gmra.mxu0 %v488
    %v748 = vpop.f32.mrf.mxu0
    %v749 = vadd.f32 %v636, %v748
    %750 = vdwg.mxu0
    %v751 = vmax.f32 %v656, 0.0
    %v752 = vmax.f32 %v659, 0.0
    %v753 = vmax.f32 %v662, 0.0
    %v754 = vmax.f32 %v665, 0.0
    %v755 = vmax.f32 %v668, 0.0
    %v756 = vmax.f32 %v671, 0.0
    %v757 = vmax.f32 %v674, 0.0
    %v758 = vmax.f32 %v677, 0.0
    %v759 = vmax.f32 %v680, 0.0
    %v760 = vmax.f32 %v683, 0.0
    %v761 = vmax.f32 %v686, 0.0
    %v762 = vmax.f32 %v689, 0.0
    %v763 = vmax.f32 %v692, 0.0
    %v764 = vmax.f32 %v695, 0.0
    %v765 = vmax.f32 %v698, 0.0
    %v766 = vmax.f32 %v701, 0.0
    %v767 = vmax.f32 %v704, 0.0
    %v768 = vmax.f32 %v707, 0.0
    %v769 = vmax.f32 %v710, 0.0
    %v770 = vmax.f32 %v713, 0.0
    %v771 = vmax.f32 %v716, 0.0
    %v772 = vmax.f32 %v719, 0.0
    %v773 = vmax.f32 %v722, 0.0
    %v774 = vmax.f32 %v725, 0.0
    %v775 = vmax.f32 %v728, 0.0
    %v776 = vmax.f32 %v731, 0.0
    %v777 = vmax.f32 %v734, 0.0
    %v778 = vmax.f32 %v737, 0.0
    %v779 = vmax.f32 %v740, 0.0
    %v780 = vmax.f32 %v743, 0.0
    %v781 = vmax.f32 %v746, 0.0
    %v782 = vmax.f32 %v749, 0.0
    %v783 = vld [vmem:[#allocation2] sm:$0xff]
    %v784 = vld [vmem:[#allocation2 + $0x8] sm:$0xff]
    %v785 = vld [vmem:[#allocation2 + $0x10] sm:$0xff]
    %v786 = vld [vmem:[#allocation2 + $0x18] sm:$0xff]
    %v787 = vld [vmem:[#allocation2 + $0x20] sm:$0xff]
    %v788 = vld [vmem:[#allocation2 + $0x28] sm:$0xff]
    %v789 = vld [vmem:[#allocation2 + $0x30] sm:$0xff]
    %v790 = vld [vmem:[#allocation2 + $0x38] sm:$0xff]
    %v791 = vld [vmem:[#allocation2 + $0x40] sm:$0xff]
    %v792 = vld [vmem:[#allocation2 + $0x48] sm:$0xff]
    %v793 = vld [vmem:[#allocation2 + $0x50] sm:$0xff]
    %v794 = vld [vmem:[#allocation2 + $0x58] sm:$0xff]
    %v795 = vld [vmem:[#allocation2 + $0x60] sm:$0xff]
    %v796 = vld [vmem:[#allocation2 + $0x68] sm:$0xff]
    %v797 = vld [vmem:[#allocation2 + $0x70] sm:$0xff]
    %v798 = vld [vmem:[#allocation2 + $0x78] sm:$0xff]
    %v799 = vld [vmem:[#allocation4] sm:$0x1]
    %v801 = vperm.slane %v799, 0
    %803 = vmatpush.msra.mxu0 %v798
    %804 = vmatpush.msra.mxu0 %v797
    %805 = vmatpush.msra.mxu0 %v796
    %806 = vmatpush.msra.mxu0 %v795
    %807 = vmatpush.msra.mxu0 %v794
    %808 = vmatpush.msra.mxu0 %v793
    %809 = vmatpush.msra.mxu0 %v792
    %810 = vmatpush.msra.mxu0 %v791
    %811 = vmatpush.msra.mxu0 %v790
    %812 = vmatpush.msra.mxu0 %v789
    %813 = vmatpush.msra.mxu0 %v788
    %814 = vmatpush.msra.mxu0 %v787
    %815 = vmatpush.msra.mxu0 %v786
    %816 = vmatpush.msra.mxu0 %v785
    %817 = vmatpush.msra.mxu0 %v784
    %818 = vmatpush.msra.mxu0 %v783
    %819 = vmatmul.f32.gmra.mxu0 %v751
    %v820 = vpop.f32.mrf.mxu0
    %v821 = vadd.f32 %v801, %v820
    %822 = vmatmul.f32.gmra.mxu0 %v752
    %v823 = vpop.f32.mrf.mxu0
    %v824 = vadd.f32 %v801, %v823
    %825 = vmatmul.f32.gmra.mxu0 %v753
    %v826 = vpop.f32.mrf.mxu0
    %v827 = vadd.f32 %v801, %v826
    %828 = vmatmul.f32.gmra.mxu0 %v754
    %v829 = vpop.f32.mrf.mxu0
    %v830 = vadd.f32 %v801, %v829
    %831 = vmatmul.f32.gmra.mxu0 %v755
    %v832 = vpop.f32.mrf.mxu0
    %v833 = vadd.f32 %v801, %v832
    %834 = vmatmul.f32.gmra.mxu0 %v756
    %v835 = vpop.f32.mrf.mxu0
    %v836 = vadd.f32 %v801, %v835
    %837 = vmatmul.f32.gmra.mxu0 %v757
    %v838 = vpop.f32.mrf.mxu0
    %v839 = vadd.f32 %v801, %v838
    %840 = vmatmul.f32.gmra.mxu0 %v758
    %v841 = vpop.f32.mrf.mxu0
    %v842 = vadd.f32 %v801, %v841
    %843 = vmatmul.f32.gmra.mxu0 %v759
    %v844 = vpop.f32.mrf.mxu0
    %v845 = vadd.f32 %v801, %v844
    %846 = vmatmul.f32.gmra.mxu0 %v760
    %v847 = vpop.f32.mrf.mxu0
    %v848 = vadd.f32 %v801, %v847
    %849 = vmatmul.f32.gmra.mxu0 %v761
    %v850 = vpop.f32.mrf.mxu0
    %v851 = vadd.f32 %v801, %v850
    %852 = vmatmul.f32.gmra.mxu0 %v762
    %v853 = vpop.f32.mrf.mxu0
    %v854 = vadd.f32 %v801, %v853
    %855 = vmatmul.f32.gmra.mxu0 %v763
    %v856 = vpop.f32.mrf.mxu0
    %v857 = vadd.f32 %v801, %v856
    %858 = vmatmul.f32.gmra.mxu0 %v764
    %v859 = vpop.f32.mrf.mxu0
    %v860 = vadd.f32 %v801, %v859
    %861 = vmatmul.f32.gmra.mxu0 %v765
    %v862 = vpop.f32.mrf.mxu0
    %v863 = vadd.f32 %v801, %v862
    %864 = vmatmul.f32.gmra.mxu0 %v766
    %v865 = vpop.f32.mrf.mxu0
    %v866 = vadd.f32 %v801, %v865
    %867 = vmatmul.f32.gmra.mxu0 %v767
    %v868 = vpop.f32.mrf.mxu0
    %v869 = vadd.f32 %v801, %v868
    %870 = vmatmul.f32.gmra.mxu0 %v768
    %v871 = vpop.f32.mrf.mxu0
    %v872 = vadd.f32 %v801, %v871
    %873 = vmatmul.f32.gmra.mxu0 %v769
    %v874 = vpop.f32.mrf.mxu0
    %v875 = vadd.f32 %v801, %v874
    %876 = vmatmul.f32.gmra.mxu0 %v770
    %v877 = vpop.f32.mrf.mxu0
    %v878 = vadd.f32 %v801, %v877
    %879 = vmatmul.f32.gmra.mxu0 %v771
    %v880 = vpop.f32.mrf.mxu0
    %v881 = vadd.f32 %v801, %v880
    %882 = vmatmul.f32.gmra.mxu0 %v772
    %v883 = vpop.f32.mrf.mxu0
    %v884 = vadd.f32 %v801, %v883
    %885 = vmatmul.f32.gmra.mxu0 %v773
    %v886 = vpop.f32.mrf.mxu0
    %v887 = vadd.f32 %v801, %v886
    %888 = vmatmul.f32.gmra.mxu0 %v774
    %v889 = vpop.f32.mrf.mxu0
    %v890 = vadd.f32 %v801, %v889
    %891 = vmatmul.f32.gmra.mxu0 %v775
    %v892 = vpop.f32.mrf.mxu0
    %v893 = vadd.f32 %v801, %v892
    %894 = vmatmul.f32.gmra.mxu0 %v776
    %v895 = vpop.f32.mrf.mxu0
    %v896 = vadd.f32 %v801, %v895
    %897 = vmatmul.f32.gmra.mxu0 %v777
    %v898 = vpop.f32.mrf.mxu0
    %v899 = vadd.f32 %v801, %v898
    %900 = vmatmul.f32.gmra.mxu0 %v778
    %v901 = vpop.f32.mrf.mxu0
    %v902 = vadd.f32 %v801, %v901
    %903 = vmatmul.f32.gmra.mxu0 %v779
    %v904 = vpop.f32.mrf.mxu0
    %v905 = vadd.f32 %v801, %v904
    %906 = vmatmul.f32.gmra.mxu0 %v780
    %v907 = vpop.f32.mrf.mxu0
    %v908 = vadd.f32 %v801, %v907
    %909 = vmatmul.f32.gmra.mxu0 %v781
    %v910 = vpop.f32.mrf.mxu0
    %v911 = vadd.f32 %v801, %v910
    %912 = vmatmul.f32.gmra.mxu0 %v782
    %v913 = vpop.f32.mrf.mxu0
    %v914 = vadd.f32 %v801, %v913
    %915 = vdwg.mxu0
    %916 = vst [vmem:[%s7] sm:$0xff] %v821
    %917 = vst [vmem:[%s7 + $0x8] sm:$0xff] %v824
    %918 = vst [vmem:[%s7 + $0x10] sm:$0xff] %v827
    %919 = vst [vmem:[%s7 + $0x18] sm:$0xff] %v830
    %920 = vst [vmem:[%s7 + $0x20] sm:$0xff] %v833
    %921 = vst [vmem:[%s7 + $0x28] sm:$0xff] %v836
    %922 = vst [vmem:[%s7 + $0x30] sm:$0xff] %v839
    %923 = vst [vmem:[%s7 + $0x38] sm:$0xff] %v842
    %924 = vst [vmem:[%s7 + $0x40] sm:$0xff] %v845
    %925 = vst [vmem:[%s7 + $0x48] sm:$0xff] %v848
    %926 = vst [vmem:[%s7 + $0x50] sm:$0xff] %v851
    %927 = vst [vmem:[%s7 + $0x58] sm:$0xff] %v854
    %928 = vst [vmem:[%s7 + $0x60] sm:$0xff] %v857
    %929 = vst [vmem:[%s7 + $0x68] sm:$0xff] %v860
    %930 = vst [vmem:[%s7 + $0x70] sm:$0xff] %v863
    %931 = vst [vmem:[%s7 + $0x78] sm:$0xff] %v866
    %932 = vst [vmem:[%s7 + $0x80] sm:$0xff] %v869
    %933 = vst [vmem:[%s7 + $0x88] sm:$0xff] %v872
    %934 = vst [vmem:[%s7 + $0x90] sm:$0xff] %v875
    %935 = vst [vmem:[%s7 + $0x98] sm:$0xff] %v878
    %936 = vst [vmem:[%s7 + $0xa0] sm:$0xff] %v881
    %937 = vst [vmem:[%s7 + $0xa8] sm:$0xff] %v884
    %938 = vst [vmem:[%s7 + $0xb0] sm:$0xff] %v887
    %939 = vst [vmem:[%s7 + $0xb8] sm:$0xff] %v890
    %940 = vst [vmem:[%s7 + $0xc0] sm:$0xff] %v893
    %941 = vst [vmem:[%s7 + $0xc8] sm:$0xff] %v896
    %942 = vst [vmem:[%s7 + $0xd0] sm:$0xff] %v899
    %943 = vst [vmem:[%s7 + $0xd8] sm:$0xff] %v902
    %944 = vst [vmem:[%s7 + $0xe0] sm:$0xff] %v905
    %945 = vst [vmem:[%s7 + $0xe8] sm:$0xff] %v908
    %946 = vst [vmem:[%s7 + $0xf0] sm:$0xff] %v911
    %947 = vst [vmem:[%s7 + $0xf8] sm:$0xff] %v914
    // Predicated region
    $region38: #{mlp_forward.1} parent=1 // pred_check
      _
    $region39: #{mlp_forward.1} parent=1 // pred_check_branch
      %949 = sbr.rel (0) target = $region41
    $region40: #{mlp_forward.1} parent=1 // pred_region
      _
    $region41: #{mlp_forward.1} parent=1 // pred_fallthru
      _
    // Predicated region
    $region42: #{mlp_forward.1} parent=1 // pred_check
      _
    $region43: #{mlp_forward.1} parent=1 // pred_check_branch
      %951 = sbr.rel (0) target = $region45
    $region44: #{mlp_forward.1} parent=1 // pred_region
      _
    $region45: #{mlp_forward.1} parent=1 // pred_fallthru
      _
    %952 = vsyncpa [#allocation3], 1
    %953 = vsyncpa [#allocation5], 1

</llo_original>
